<compile_context>
chip_gen: v7x
topology: tpu7x:2x2x1
jax: 0.10.0
libtpu: 0.0.40
codegen_flags: <defaults>
</compile_context>

<pallas_src>
import functools

import jax
import jax.numpy as jnp
from jax.experimental import pallas as pl
from jax.experimental.pallas import tpu as pltpu


def _round_up(x, m):
    return ((x + m - 1) // m) * m


# ---------- kernel 1: projection  y0 = x @ W^T  (bf16 MXU),  h0 = alpha * y0 ----------
def _project_kernel(x_ref, w_ref, y_ref, h_ref, *, alpha):
    y = jnp.dot(x_ref[...], w_ref[...], preferred_element_type=jnp.float32)
    y_ref[...] = y.astype(y_ref.dtype)     # bf16 propagation seed
    h_ref[...] = alpha * y                 # f32 accumulator seed


# ---------- kernel 2: one propagation step ----------
#   y_next = A_hat @ y_prev        (bf16 MXU, f32 accumulation in scratch)
#   h_next = h_prev + coef * y_next
def _propagate_kernel(a_ref, y_ref, h_ref, y_out_ref, h_out_ref, acc_ref, *, coef):
    j = pl.program_id(1)

    @pl.when(j == 0)
    def _():
        acc_ref[...] = jnp.zeros_like(acc_ref)

    acc_ref[...] += jnp.dot(a_ref[...], y_ref[...],
                            preferred_element_type=jnp.float32)

    @pl.when(j == pl.num_programs(1) - 1)
    def _():
        acc = acc_ref[...]
        y_out_ref[...] = acc.astype(y_out_ref.dtype)
        h_out_ref[...] = h_ref[...] + coef * acc


# ---------- kernel 3: epilogue  bias + (masked) log_softmax, lane-dense output ----------
def _epilogue_kernel(h_ref, b_ref, out_ref):
    logits = h_ref[...] + b_ref[...]       # padded class lanes carry -1e30 bias
    m = jnp.max(logits, axis=1, keepdims=True)
    z = logits - m
    lse = jnp.log(jnp.sum(jnp.exp(z), axis=1, keepdims=True))
    out_ref[...] = z - lse


def ssgc_forward(x, edge_index, weight, bias, *, K, alpha):
    """SSGC forward. x: [N, F] f32, edge_index: [2, E] int32,
    weight: [C, F] (PyTorch Linear layout), bias: [C]."""
    N, F = x.shape
    C = weight.shape[0]

    # --- Glue (plain JAX): dense GCN-normalized adjacency from edge_index. ---
    # TODO(synk): for large sparse graphs replace the dense N^2 adjacency with a
    # CSR + scalar-prefetch Pallas kernel; also cache `adj` across forward calls.
    src, dst = edge_index[0], edge_index[1]
    A = jnp.zeros((N, N), jnp.float32).at[src, dst].set(1.0)
    A = A + jnp.eye(N, dtype=jnp.float32)
    deg = jnp.sum(A, axis=1)
    d = jnp.where(deg > 0, 1.0 / jnp.sqrt(deg), 0.0)
    adj = d[:, None] * A * d[None, :]

    # --- Padding / tiling choices. ---
    f32, bf16 = jnp.float32, jnp.bfloat16
    c_pad = _round_up(max(C, 1), 128)          # lane-dense class dimension
    if N <= 512:
        n_pad = _round_up(N, 128)
        tm = tk = n_pad                        # tiny graph: single tile
    else:
        tm, tk = 256, 512                      # fits v7x 64 MiB VMEM w/ 2x buffering
        n_pad = _round_up(N, 512)
    n_row = n_pad // tm
    n_col = n_pad // tk

    adj_p = jnp.zeros((n_pad, n_pad), bf16).at[:N, :N].set(adj.astype(bf16))
    x_p = jnp.zeros((n_pad, F), bf16).at[:N, :].set(x.astype(bf16))
    w_p = jnp.zeros((F, c_pad), bf16).at[:, :C].set(weight.T.astype(bf16))
    # -1e30 in padded class lanes -> exp underflows to 0 -> softmax normalizer exact.
    b_p = jnp.full((1, c_pad), -1e30, f32).at[0, :C].set(bias.astype(f32))

    row_params = pltpu.CompilerParams(dimension_semantics=("parallel",))
    prop_params = pltpu.CompilerParams(dimension_semantics=("parallel", "arbitrary"))

    # --- 1) projection: y0 = x @ W^T ; h0 = alpha * y0 ---
    y0, h0 = pl.pallas_call(
        functools.partial(_project_kernel, alpha=float(alpha)),
        out_shape=(jax.ShapeDtypeStruct((n_pad, c_pad), bf16),
                   jax.ShapeDtypeStruct((n_pad, c_pad), f32)),
        grid_spec=pltpu.PrefetchScalarGridSpec(
            num_scalar_prefetch=0,
            grid=(n_row,),
            in_specs=[pl.BlockSpec((tm, F), lambda i: (i, 0)),
                      pl.BlockSpec((F, c_pad), lambda i: (0, 0))],
            out_specs=[pl.BlockSpec((tm, c_pad), lambda i: (i, 0)),
                       pl.BlockSpec((tm, c_pad), lambda i: (i, 0))],
        ),
        compiler_params=row_params,
    )(x_p, w_p)

    # --- 2) K propagation steps on the small [N, C_pad] state. ---
    coef = (1.0 - alpha) / K
    propagate = pl.pallas_call(
        functools.partial(_propagate_kernel, coef=float(coef)),
        out_shape=(jax.ShapeDtypeStruct((n_pad, c_pad), bf16),
                   jax.ShapeDtypeStruct((n_pad, c_pad), f32)),
        grid_spec=pltpu.PrefetchScalarGridSpec(
            num_scalar_prefetch=0,
            grid=(n_row, n_col),                                     # reduction last
            in_specs=[pl.BlockSpec((tm, tk), lambda i, j: (i, j)),     # A_hat tile (bf16)
                      pl.BlockSpec((tk, c_pad), lambda i, j: (j, 0)),  # y_prev slab
                      pl.BlockSpec((tm, c_pad), lambda i, j: (i, 0))], # h_prev rows
            out_specs=[pl.BlockSpec((tm, c_pad), lambda i, j: (i, 0)),
                       pl.BlockSpec((tm, c_pad), lambda i, j: (i, 0))],
            scratch_shapes=[pltpu.VMEM((tm, c_pad), f32)],
        ),
        compiler_params=prop_params,
    )
    y, h = y0, h0
    for _ in range(K):                         # static K -> K pipelined matmul calls
        y, h = propagate(adj_p, y, h)

    # --- 3) epilogue: bias + log_softmax over (masked) lane-dense classes. ---
    out_p = pl.pallas_call(
        _epilogue_kernel,
        out_shape=jax.ShapeDtypeStruct((n_pad, c_pad), f32),
        grid_spec=pltpu.PrefetchScalarGridSpec(
            num_scalar_prefetch=0,
            grid=(n_row,),
            in_specs=[pl.BlockSpec((tm, c_pad), lambda i: (i, 0)),
                      pl.BlockSpec((1, c_pad), lambda i: (0, 0))],
            out_specs=pl.BlockSpec((tm, c_pad), lambda i: (i, 0)),
        ),
        compiler_params=row_params,
    )(h, b_p)

    return out_p[:N, :C]


# ---------- Pure-JAX reference (exact f32) ----------
def ssgc_reference(x, edge_index, weight, bias, *, K, alpha):
    N = x.shape[0]
    src, dst = edge_index[0], edge_index[1]
    A = jnp.zeros((N, N), jnp.float32).at[src, dst].set(1.0) + jnp.eye(N)
    deg = jnp.sum(A, axis=1)
    d = jnp.where(deg > 0, 1.0 / jnp.sqrt(deg), 0.0)
    adj = d[:, None] * A * d[None, :]
    h = alpha * x
    cur = x
    for _ in range(K):
        cur = adj @ cur
        h = h + (1.0 - alpha) / K * cur
    logits = h @ weight.T + bias
    return jax.nn.log_softmax(logits, axis=1)


if __name__ == "__main__":
    key = jax.random.PRNGKey(0)
    k_x, k_e, k_w, k_b = jax.random.split(key, 4)

    # Small graph: N nodes, F features, C classes.
    N, F, C = 16, 32, 8
    K, ALPHA = 4, 0.1
    E = 48

    x = jax.random.normal(k_x, (N, F), dtype=jnp.float32)
    edge_index = jax.random.randint(k_e, (2, E), 0, N, dtype=jnp.int32)

    bound = 1.0 / (F ** 0.5)
    weight = jax.random.uniform(k_w, (C, F), jnp.float32, -bound, bound)
    bias = jax.random.uniform(k_b, (C,), jnp.float32, -bound, bound)

    out = ssgc_forward(x, edge_index, weight, bias, K=K, alpha=ALPHA)
    out = jax.block_until_ready(out)

    ref = ssgc_reference(x, edge_index, weight, bias, K=K, alpha=ALPHA)
    assert out.shape == (N, C)
    # bf16 adjacency/state on the MXU (f32 accumulation) -> small drift vs f32 ref.
    assert jnp.allclose(out, ref, atol=5e-2, rtol=5e-2), "mismatch vs reference"

    print("KERNEL_OK")
</pallas_src>

<mosaic_0001>
module attributes {stable_mosaic.version = 11 : i64} {
  func.func @_project_kernel(%arg0: i32, %arg1: memref<128x32xbf16, #tpu.memory_space<vmem>>, %arg2: memref<32x128xbf16, #tpu.memory_space<vmem>>, %arg3: memref<128x128xbf16, #tpu.memory_space<vmem>>, %arg4: memref<128x128xf32, #tpu.memory_space<vmem>>) attributes {dimension_semantics = [#tpu.dimension_semantics<parallel>], iteration_bounds = array<i64: 1>, scalar_prefetch = 0 : i64, scratch_operands = 0 : i64, tpu.core_type = #tpu.core_type<tc>, window_params = [{transform_indices = @transform_0, window_bounds = array<i64: 128, 32>}, {pipeline_mode = #tpu.pipeline_mode<synchronous>, transform_indices = @transform_1, window_bounds = array<i64: 32, 128>}, {transform_indices = @transform_2, window_bounds = array<i64: 128, 128>}, {transform_indices = @transform_3, window_bounds = array<i64: 128, 128>}]} {
    %c0 = arith.constant 0 : index
    %c0_0 = arith.constant 0 : index
    %0 = vector.load %arg1[%c0, %c0_0] : memref<128x32xbf16, #tpu.memory_space<vmem>>, vector<128x32xbf16>
    %c0_1 = arith.constant 0 : index
    %c0_2 = arith.constant 0 : index
    %1 = vector.load %arg2[%c0_1, %c0_2] : memref<32x128xbf16, #tpu.memory_space<vmem>>, vector<32x128xbf16>
    %cst = arith.constant dense<0.000000e+00> : vector<128x128xf32>
    %2 = tpu.matmul %0, %1, %cst {dimension_numbers = #tpu.dot_dimension_numbers<[1], [0], [0], [1], [0, 0, 1, 1], [], []>} : vector<128x32xbf16>, vector<32x128xbf16>, vector<128x128xf32> -> vector<128x128xf32>
    %3 = arith.truncf %2 : vector<128x128xf32> to vector<128x128xbf16>
    %c0_3 = arith.constant 0 : index
    %c0_4 = arith.constant 0 : index
    %4 = vector.load %arg3[%c0_3, %c0_4] : memref<128x128xbf16, #tpu.memory_space<vmem>>, vector<128x128xbf16>
    tpu.vector_store %arg3[%c0_3, %c0_4], %3 {strides = array<i32>} : memref<128x128xbf16, #tpu.memory_space<vmem>>, vector<128x128xbf16>,
    %cst_5 = arith.constant 1.000000e-01 : f32
    %5 = vector.broadcast %cst_5 : f32 to vector<128x128xf32>
    %6 = arith.mulf %5, %2 : vector<128x128xf32>
    %c0_6 = arith.constant 0 : index
    %c0_7 = arith.constant 0 : index
    %7 = vector.load %arg4[%c0_6, %c0_7] : memref<128x128xf32, #tpu.memory_space<vmem>>, vector<128x128xf32>
    tpu.vector_store %arg4[%c0_6, %c0_7], %6 {strides = array<i32>} : memref<128x128xf32, #tpu.memory_space<vmem>>, vector<128x128xf32>,
    return
  }
  func.func @transform_0(%arg0: i32) -> (i32, i32) {
    %c0_i32 = arith.constant 0 : i32
    %c0_i32_0 = arith.constant 0 : i32
    return %arg0, %c0_i32 : i32, i32
  }
  func.func @transform_1(%arg0: i32) -> (i32, i32) {
    %c0_i32 = arith.constant 0 : i32
    %c0_i32_0 = arith.constant 0 : i32
    %c0_i32_1 = arith.constant 0 : i32
    return %c0_i32, %c0_i32_0 : i32, i32
  }
  func.func @transform_2(%arg0: i32) -> (i32, i32) {
    %c0_i32 = arith.constant 0 : i32
    %c0_i32_0 = arith.constant 0 : i32
    return %arg0, %c0_i32 : i32, i32
  }
  func.func @transform_3(%arg0: i32) -> (i32, i32) {
    %c0_i32 = arith.constant 0 : i32
    %c0_i32_0 = arith.constant 0 : i32
    return %arg0, %c0_i32 : i32, i32
  }
}

</mosaic_0001>

<llo_original>
// kernel: tpu_custom_call.1
$region0: #{tpu_custom_call.1}
  #allocation0 [shape = 'u32[]', space=smem, size = 0x4, offset = 0x4, fixed_abs, tag = 'smem constant byte address 0x4 - core index']
  #allocation1 [shape = 'u32[144,128]{1,0:T(1,128)}', space=vmem, size = 0x12000, scoped, tag = 'internal scratch']
  %s0 = inlined_call_operand.vmem [shape: bf16[128,32], index: 0, kind: input, shape index: {}]
  %s1 = inlined_call_operand.vmem [shape: bf16[32,128], index: 1, kind: input, shape index: {}]
  %s2 = inlined_call_operand.hbm [shape: bf16[128,128], index: 2, kind: output, shape index: {0}]
  %s3 = inlined_call_operand.hbm [shape: f32[128,128], index: 3, kind: output, shape index: {1}]
  %4 = xla_tuple %s2, %s3
  %s5 = sld [smem:[#allocation0]]
  $region26: #{tpu_custom_call.1} parent=0
    _
  %s7 = ssub.s32 1, %s5
  %s8 = scalar_select 0, %s7, %s5
  $region1: #{tpu_custom_call.1} parent=0
    #allocation2 [shape = 'u8[32768]{0}', space=vmem, size = 0x8000, scoped, tag = 'output window, operand 0, single buffered']
    #allocation3 [shape = 's32[1]{0}', space=sflag, size = 0x4, scoped, tag = 'scoped memory for tpu_custom_call.1']
    #allocation4 [shape = 'u8[65536]{0}', space=vmem, size = 0x10000, scoped, tag = 'output window, operand 1, single buffered']
    #allocation5 [shape = 's32[1]{0}', space=sflag, size = 0x4, scoped, tag = 'scoped memory for tpu_custom_call.1']
    %9 = vsyncpa [#allocation3], 0
    %10 = vsyncpa [#allocation5], 0
    // Predicated region
    $region2: #{tpu_custom_call.1} parent=1 // pred_check
      _
    $region3: #{tpu_custom_call.1} parent=1 // pred_check_branch
      %12 = sbr.rel (0) target = $region5
    $region4: #{tpu_custom_call.1} parent=1 // pred_region
      _
    $region5: #{tpu_custom_call.1} parent=1 // pred_fallthru
      _
    // Predicated region
    $region6: #{tpu_custom_call.1} parent=1 // pred_check
      _
    $region7: #{tpu_custom_call.1} parent=1 // pred_check_branch
      %14 = sbr.rel (0) target = $region9
    $region8: #{tpu_custom_call.1} parent=1 // pred_region
      _
    $region9: #{tpu_custom_call.1} parent=1 // pred_fallthru
      _
    %v16 = vld [vmem:[%s0] sm:$0xf]
    %v17 = vld [vmem:[%s0 + $0x4] sm:$0xf]
    %v18 = vld [vmem:[%s0 + $0x8] sm:$0xf]
    %v19 = vld [vmem:[%s0 + $0xc] sm:$0xf]
    %v20 = vld [vmem:[%s0 + $0x10] sm:$0xf]
    %v21 = vld [vmem:[%s0 + $0x14] sm:$0xf]
    %v22 = vld [vmem:[%s0 + $0x18] sm:$0xf]
    %v23 = vld [vmem:[%s0 + $0x1c] sm:$0xf]
    %v24 = vld [vmem:[%s0 + $0x20] sm:$0xf]
    %v25 = vld [vmem:[%s0 + $0x24] sm:$0xf]
    %v26 = vld [vmem:[%s0 + $0x28] sm:$0xf]
    %v27 = vld [vmem:[%s0 + $0x2c] sm:$0xf]
    %v28 = vld [vmem:[%s0 + $0x30] sm:$0xf]
    %v29 = vld [vmem:[%s0 + $0x34] sm:$0xf]
    %v30 = vld [vmem:[%s0 + $0x38] sm:$0xf]
    %v31 = vld [vmem:[%s0 + $0x3c] sm:$0xf]
    %v32 = vld [vmem:[%s1] sm:$0xf]
    %v33 = vld [vmem:[%s1 + $0x4] sm:$0xf]
    %v34 = vld [vmem:[%s1 + $0x8] sm:$0xf]
    %v35 = vld [vmem:[%s1 + $0xc] sm:$0xf]
    %v52 = vunpack.c.l.b16 %v16
    %v53 = vunpack.c.l.b16 %v17
    %v54 = vunpack.c.l.b16 %v18
    %v55 = vunpack.c.l.b16 %v19
    %v56 = vunpack.c.l.b16 %v20
    %v57 = vunpack.c.l.b16 %v21
    %v58 = vunpack.c.l.b16 %v22
    %v59 = vunpack.c.l.b16 %v23
    %v60 = vunpack.c.l.b16 %v24
    %v61 = vunpack.c.l.b16 %v25
    %v62 = vunpack.c.l.b16 %v26
    %v63 = vunpack.c.l.b16 %v27
    %v64 = vunpack.c.l.b16 %v28
    %v65 = vunpack.c.l.b16 %v29
    %v66 = vunpack.c.l.b16 %v30
    %v67 = vunpack.c.l.b16 %v31
    %v68 = vpack.c.b16 %v53, %v52
    %v69 = vpack.c.b16 %v55, %v54
    %v70 = vpack.c.b16 %v57, %v56
    %v71 = vpack.c.b16 %v59, %v58
    %v72 = vpack.c.b16 %v61, %v60
    %v73 = vpack.c.b16 %v63, %v62
    %v74 = vpack.c.b16 %v65, %v64
    %v75 = vpack.c.b16 %v67, %v66
    %v80 = vunpack.c.l.b16 %v32
    %v81 = vunpack.c.l.b16 %v33
    %v82 = vunpack.c.l.b16 %v34
    %v83 = vunpack.c.l.b16 %v35
    %v84 = vpack.c.b16 %v81, %v80
    %v85 = vpack.c.b16 %v83, %v82
    %vm88 = vcmask 261120
    %v90 = vsel %vm88, %v68, 0
    %v93 = vsel %vm88, %v69, 0
    %v96 = vsel %vm88, %v70, 0
    %v99 = vsel %vm88, %v71, 0
    %v102 = vsel %vm88, %v72, 0
    %v105 = vsel %vm88, %v73, 0
    %v108 = vsel %vm88, %v74, 0
    %v111 = vsel %vm88, %v75, 0
    %113 = vmatprep.subr.bf16.mxu0 0
    %114 = vmatpush1.bf16.msra.mxu0 %v84
    %115 = vmatprep.subr.bf16.mxu0 0
    %116 = vmatpush1.bf16.msra.mxu0 %v85
    %117 = vmatprep.subr.bf16.mxu0 0
    %118 = vmatpush1.bf16.msra.mxu0 0
    %119 = vmatprep.subr.bf16.mxu0 0
    %120 = vmatpush1.bf16.msra.mxu0 0
    %121 = vmatprep.subr.bf16.mxu0 0
    %122 = vmatpush1.bf16.msra.mxu0 0
    %123 = vmatprep.subr.bf16.mxu0 0
    %124 = vmatpush1.bf16.msra.mxu0 0
    %125 = vmatprep.subr.bf16.mxu0 0
    %126 = vmatpush1.bf16.msra.mxu0 0
    %127 = vmatprep.subr.bf16.mxu0 0
    %128 = vmatpush1.bf16.msra.mxu0 0
    %129 = vmatprep.subr.bf16.mxu0 0
    %130 = vmatpush1.bf16.msra.mxu0 0
    %131 = vmatprep.subr.bf16.mxu0 0
    %132 = vmatpush1.bf16.msra.mxu0 0
    %133 = vmatprep.subr.bf16.mxu0 0
    %134 = vmatpush1.bf16.msra.mxu0 0
    %135 = vmatprep.subr.bf16.mxu0 0
    %136 = vmatpush1.bf16.msra.mxu0 0
    %137 = vmatprep.subr.bf16.mxu0 0
    %138 = vmatpush1.bf16.msra.mxu0 0
    %139 = vmatprep.subr.bf16.mxu0 0
    %140 = vmatpush1.bf16.msra.mxu0 0
    %141 = vmatprep.subr.bf16.mxu0 0
    %142 = vmatpush1.bf16.msra.mxu0 0
    %143 = vmatprep.subr.bf16.mxu0 0
    %144 = vmatpush1.bf16.msra.mxu0 0
    %145 = vmatprep.mubr.bf16.mxu0 0
    %146 = vmatmul.mubr.bf16.gmra.mrb[0].mxu0 %v90
    %v147 = vpop.f32.mrb[0].mxu0
    %v148 = vadd.f32 0.0, %v147
    %v149 = vpop.f32.mrb[0].mxu0
    %v150 = vpop.f32.mrb[0].mxu0
    %v151 = vadd.f32 0.0, %v150
    %v152 = vpop.f32.mrb[0].mxu0
    %153 = vmatprep.mubr.bf16.mxu0 0
    %154 = vmatmul.mubr.bf16.gmra.mrb[0].mxu0 %v93
    %v155 = vpop.f32.mrb[0].mxu0
    %v156 = vadd.f32 0.0, %v155
    %v157 = vpop.f32.mrb[0].mxu0
    %v158 = vpop.f32.mrb[0].mxu0
    %v159 = vadd.f32 0.0, %v158
    %v160 = vpop.f32.mrb[0].mxu0
    %161 = vmatprep.mubr.bf16.mxu0 0
    %162 = vmatmul.mubr.bf16.gmra.mrb[0].mxu0 %v96
    %v163 = vpop.f32.mrb[0].mxu0
    %v164 = vadd.f32 0.0, %v163
    %v165 = vpop.f32.mrb[0].mxu0
    %v166 = vpop.f32.mrb[0].mxu0
    %v167 = vadd.f32 0.0, %v166
    %v168 = vpop.f32.mrb[0].mxu0
    %169 = vmatprep.mubr.bf16.mxu0 0
    %170 = vmatmul.mubr.bf16.gmra.mrb[0].mxu0 %v99
    %v171 = vpop.f32.mrb[0].mxu0
    %v172 = vadd.f32 0.0, %v171
    %v173 = vpop.f32.mrb[0].mxu0
    %v174 = vpop.f32.mrb[0].mxu0
    %v175 = vadd.f32 0.0, %v174
    %v176 = vpop.f32.mrb[0].mxu0
    %177 = vmatprep.mubr.bf16.mxu0 0
    %178 = vmatmul.mubr.bf16.gmra.mrb[0].mxu0 %v102
    %v179 = vpop.f32.mrb[0].mxu0
    %v180 = vadd.f32 0.0, %v179
    %v181 = vpop.f32.mrb[0].mxu0
    %v182 = vpop.f32.mrb[0].mxu0
    %v183 = vadd.f32 0.0, %v182
    %v184 = vpop.f32.mrb[0].mxu0
    %185 = vmatprep.mubr.bf16.mxu0 0
    %186 = vmatmul.mubr.bf16.gmra.mrb[0].mxu0 %v105
    %v187 = vpop.f32.mrb[0].mxu0
    %v188 = vadd.f32 0.0, %v187
    %v189 = vpop.f32.mrb[0].mxu0
    %v190 = vpop.f32.mrb[0].mxu0
    %v191 = vadd.f32 0.0, %v190
    %v192 = vpop.f32.mrb[0].mxu0
    %193 = vmatprep.mubr.bf16.mxu0 0
    %194 = vmatmul.mubr.bf16.gmra.mrb[0].mxu0 %v108
    %v195 = vpop.f32.mrb[0].mxu0
    %v196 = vadd.f32 0.0, %v195
    %v197 = vpop.f32.mrb[0].mxu0
    %v198 = vpop.f32.mrb[0].mxu0
    %v199 = vadd.f32 0.0, %v198
    %v200 = vpop.f32.mrb[0].mxu0
    %201 = vmatprep.mubr.bf16.mxu0 0
    %202 = vmatmul.mubr.bf16.gmra.mrb[0].mxu0 %v111
    %v203 = vpop.f32.mrb[0].mxu0
    %v204 = vadd.f32 0.0, %v203
    %v205 = vpop.f32.mrb[0].mxu0
    %v206 = vpop.f32.mrb[0].mxu0
    %v207 = vadd.f32 0.0, %v206
    %v208 = vpop.f32.mrb[0].mxu0
    %209 = vdwg.mxu0
    %v210 = vpack.c.bf16 %v151, %v148
    %v211 = vpack.c.bf16 %v159, %v156
    %v212 = vpack.c.bf16 %v167, %v164
    %v213 = vpack.c.bf16 %v175, %v172
    %v214 = vpack.c.bf16 %v183, %v180
    %v215 = vpack.c.bf16 %v191, %v188
    %v216 = vpack.c.bf16 %v199, %v196
    %v217 = vpack.c.bf16 %v207, %v204
    %v226 = vunpack.c.l.b16 %v210
    %v227 = vunpack.c.h.b16 %v210
    %v228 = vunpack.c.l.b16 %v211
    %v229 = vunpack.c.h.b16 %v211
    %v230 = vunpack.c.l.b16 %v212
    %v231 = vunpack.c.h.b16 %v212
    %v232 = vunpack.c.l.b16 %v213
    %v233 = vunpack.c.h.b16 %v213
    %v234 = vunpack.c.l.b16 %v214
    %v235 = vunpack.c.h.b16 %v214
    %v236 = vunpack.c.l.b16 %v215
    %v237 = vunpack.c.h.b16 %v215
    %v238 = vunpack.c.l.b16 %v216
    %v239 = vunpack.c.h.b16 %v216
    %v240 = vunpack.c.l.b16 %v217
    %v241 = vunpack.c.h.b16 %v217
    %v242 = vpack.c.b16 %v226, %v226
    %v243 = vpack.c.b16 %v227, %v227
    %v244 = vpack.c.b16 %v228, %v228
    %v245 = vpack.c.b16 %v229, %v229
    %v246 = vpack.c.b16 %v230, %v230
    %v247 = vpack.c.b16 %v231, %v231
    %v248 = vpack.c.b16 %v232, %v232
    %v249 = vpack.c.b16 %v233, %v233
    %v250 = vpack.c.b16 %v234, %v234
    %v251 = vpack.c.b16 %v235, %v235
    %v252 = vpack.c.b16 %v236, %v236
    %v253 = vpack.c.b16 %v237, %v237
    %v254 = vpack.c.b16 %v238, %v238
    %v255 = vpack.c.b16 %v239, %v239
    %v256 = vpack.c.b16 %v240, %v240
    %v257 = vpack.c.b16 %v241, %v241
    %274 = vst [vmem:[#allocation2] sm:$0xf] %v242
    %275 = vst [vmem:[#allocation2 + $0x4] sm:$0xf] %v243
    %276 = vst [vmem:[#allocation2 + $0x8] sm:$0xf] %v244
    %277 = vst [vmem:[#allocation2 + $0xc] sm:$0xf] %v245
    %278 = vst [vmem:[#allocation2 + $0x10] sm:$0xf] %v246
    %279 = vst [vmem:[#allocation2 + $0x14] sm:$0xf] %v247
    %280 = vst [vmem:[#allocation2 + $0x18] sm:$0xf] %v248
    %281 = vst [vmem:[#allocation2 + $0x1c] sm:$0xf] %v249
    %282 = vst [vmem:[#allocation2 + $0x20] sm:$0xf] %v250
    %283 = vst [vmem:[#allocation2 + $0x24] sm:$0xf] %v251
    %284 = vst [vmem:[#allocation2 + $0x28] sm:$0xf] %v252
    %285 = vst [vmem:[#allocation2 + $0x2c] sm:$0xf] %v253
    %286 = vst [vmem:[#allocation2 + $0x30] sm:$0xf] %v254
    %287 = vst [vmem:[#allocation2 + $0x34] sm:$0xf] %v255
    %288 = vst [vmem:[#allocation2 + $0x38] sm:$0xf] %v256
    %289 = vst [vmem:[#allocation2 + $0x3c] sm:$0xf] %v257
    %v290 = vmul.f32 %v148, 0.1
    %v291 = vmul.f32 %v151, 0.1
    %v292 = vmul.f32 %v156, 0.1
    %v293 = vmul.f32 %v159, 0.1
    %v294 = vmul.f32 %v164, 0.1
    %v295 = vmul.f32 %v167, 0.1
    %v296 = vmul.f32 %v172, 0.1
    %v297 = vmul.f32 %v175, 0.1
    %v298 = vmul.f32 %v180, 0.1
    %v299 = vmul.f32 %v183, 0.1
    %v300 = vmul.f32 %v188, 0.1
    %v301 = vmul.f32 %v191, 0.1
    %v302 = vmul.f32 %v196, 0.1
    %v303 = vmul.f32 %v199, 0.1
    %v304 = vmul.f32 %v204, 0.1
    %v305 = vmul.f32 %v207, 0.1
    %306 = vst [vmem:[#allocation4] sm:$0xff] %v290
    %307 = vst [vmem:[#allocation4 + $0x8] sm:$0xff] %v291
    %308 = vst [vmem:[#allocation4 + $0x10] sm:$0xff] %v292
    %309 = vst [vmem:[#allocation4 + $0x18] sm:$0xff] %v293
    %310 = vst [vmem:[#allocation4 + $0x20] sm:$0xff] %v294
    %311 = vst [vmem:[#allocation4 + $0x28] sm:$0xff] %v295
    %312 = vst [vmem:[#allocation4 + $0x30] sm:$0xff] %v296
    %313 = vst [vmem:[#allocation4 + $0x38] sm:$0xff] %v297
    %314 = vst [vmem:[#allocation4 + $0x40] sm:$0xff] %v298
    %315 = vst [vmem:[#allocation4 + $0x48] sm:$0xff] %v299
    %316 = vst [vmem:[#allocation4 + $0x50] sm:$0xff] %v300
    %317 = vst [vmem:[#allocation4 + $0x58] sm:$0xff] %v301
    %318 = vst [vmem:[#allocation4 + $0x60] sm:$0xff] %v302
    %319 = vst [vmem:[#allocation4 + $0x68] sm:$0xff] %v303
    %320 = vst [vmem:[#allocation4 + $0x70] sm:$0xff] %v304
    %321 = vst [vmem:[#allocation4 + $0x78] sm:$0xff] %v305
    // Predicated region
    $region10: #{tpu_custom_call.1} parent=1 // pred_check
      _
    $region11: #{tpu_custom_call.1} parent=1 // pred_check_branch
      %323 = sbr.rel (0) target = $region13
    $region12: #{tpu_custom_call.1} parent=1 // pred_region
      %s325 = ssub.s32 1024, 1024
      %326 = vsyncadd [#allocation3], %s325
      %s327 = sshll.u32 [#allocation2], 4
      %s328 = int_to_ptr.vmem [resolvable:$true] %s327
      %333 = dma.vmem_to_hbm [thread:$0]  %s328, 1024, %s2, [#allocation3], 64, 64, 4
    $region13: #{tpu_custom_call.1} parent=1 // pred_fallthru
      _
    // Predicated region
    $region14: #{tpu_custom_call.1} parent=1 // pred_check
      _
    $region15: #{tpu_custom_call.1} parent=1 // pred_check_branch
      %335 = sbr.rel (0) target = $region17
    $region16: #{tpu_custom_call.1} parent=1 // pred_region
      %s337 = ssub.s32 2048, 2048
      %338 = vsyncadd [#allocation5], %s337
      %s339 = sshll.u32 [#allocation4], 4
      %s340 = int_to_ptr.vmem [resolvable:$true] %s339
      %345 = dma.vmem_to_hbm [thread:$0]  %s340, 2048, %s3, [#allocation5], 128, 128, 8
    $region17: #{tpu_custom_call.1} parent=1 // pred_fallthru
      _
    // Predicated region
    $region18: #{tpu_custom_call.1} parent=1 // pred_check
      _
    $region19: #{tpu_custom_call.1} parent=1 // pred_check_branch
      %347 = sbr.rel (0) target = $region21
    $region20: #{tpu_custom_call.1} parent=1 // pred_region
      %348 = dma.done [#allocation3], 1024
    $region21: #{tpu_custom_call.1} parent=1 // pred_fallthru
      _
    // Predicated region
    $region22: #{tpu_custom_call.1} parent=1 // pred_check
      _
    $region23: #{tpu_custom_call.1} parent=1 // pred_check_branch
      %350 = sbr.rel (0) target = $region25
    $region24: #{tpu_custom_call.1} parent=1 // pred_region
      %351 = dma.done [#allocation5], 2048
    $region25: #{tpu_custom_call.1} parent=1 // pred_fallthru
      _
    %352 = vsyncpa [#allocation3], 1
    %353 = vsyncpa [#allocation5], 1

</llo_original>
